<compile_context>
chip_gen: v5e
topology: v5e:2x2
jax: 0.10.0
libtpu: 0.0.40
codegen_flags: <defaults>
</compile_context>

<pallas_src>
import functools

import jax
import jax.numpy as jnp
from jax.experimental import pallas as pl
from jax.experimental.pallas import tpu as pltpu

HIDDEN = 32
LANE = 128
CHUNK = 2048  # lanes per inner iteration -> (32, 2048) f32 intermediates = 256 KiB


def _round_up(x, m):
    return (x + m - 1) // m * m


def _detect_num_cores():
    """Best-effort TensorCores-per-chip (2 on v7x, else 1).  Never raises."""
    try:
        info = pltpu.get_tpu_info()
        for attr in ("num_cores", "core_count", "num_tensorcores"):
            v = getattr(info, attr, None)
            if isinstance(v, int) and v > 0:
                return v
    except Exception:
        pass
    try:
        kind = getattr(jax.devices()[0], "device_kind", "")
        if "7" in kind:  # v7x family: 2 TensorCores per chip
            return 2
    except Exception:
        pass
    return 1


def _pinn_kernel(t_ref, w1_ref, b1_ref, w2_ref, b2_ref, w3_ref, b3_ref, o_ref,
                 *, chunk, bf16_tanh):
    """Fused 3-layer MLP, feature-major (batch on lanes), chunked over lanes.

    t_ref  : (1, BLOCK)   batch on the 128-lane axis
    w1_ref : (32, 1),  b1_ref : (32, 1)
    w2_ref : (32, 32), b2_ref : (32, 1)
    w3_ref : (32, 1),  b3_ref : (1, 1) scalar in SMEM
    o_ref  : (1, BLOCK)
    """
    # Hoist the (tiny) weights out of the chunk loop: loaded once per step.
    w1 = w1_ref[...]
    b1 = b1_ref[...]
    w2 = w2_ref[...]
    b2 = b2_ref[...]
    w3 = w3_ref[...]
    b3 = b3_ref[0, 0]
    if bf16_tanh:
        w2_mx = w2.astype(jnp.bfloat16)

    n_chunks = o_ref.shape[1] // chunk  # static

    def body(c, carry):
        start = pl.multiple_of(c * chunk, chunk)
        t = t_ref[:, pl.ds(start, chunk)]                     # (1, chunk)

        # Layer 1: Linear(1, 32), K=1 outer product -> VPU broadcast multiply.
        z1 = w1 * t + b1                                       # (32, chunk)
        if bf16_tanh:
            # Optional faster-EUP path (v6e/v7x); changes numerics slightly.
            h1 = jnp.tanh(z1.astype(jnp.bfloat16))
            z2 = jnp.dot(w2_mx, h1, preferred_element_type=jnp.float32) + b2
            h2 = jnp.tanh(z2.astype(jnp.bfloat16)).astype(jnp.float32)
        else:
            h1 = jnp.tanh(z1)                                  # (32, chunk)
            # Layer 2: the one real matmul (32x32 contraction) on the MXU.
            z2 = jnp.dot(w2, h1, preferred_element_type=jnp.float32) + b2
            h2 = jnp.tanh(z2)                                  # (32, chunk)

        # Layer 3: Linear(32, 1) -> elementwise mul + sublane reduce (XLU),
        # keeping the output lane-dense; bias is a scalar read from SMEM.
        out = jnp.sum(w3 * h2, axis=0, keepdims=True) + b3     # (1, chunk)
        o_ref[:, pl.ds(start, chunk)] = out.astype(o_ref.dtype)
        return carry

    jax.lax.fori_loop(0, n_chunks, body, 0, unroll=True)


@functools.partial(jax.jit,
                   static_argnames=("block_batch", "num_cores", "bf16_tanh"))
def pinn_forward(t, params, *, block_batch=32768, num_cores=None,
                 bf16_tanh=False):
    """t: (N, 1) f32 -> (N, 1) f32.  params: feature-major (see init_params)."""
    assert block_batch % LANE == 0, "block_batch must be a multiple of 128"
    n = t.shape[0]

    w1, b1 = params["w1"], params["b1"]     # (32, 1), (32, 1)
    w2, b2 = params["w2"], params["b2"]     # (32, 32), (32, 1)
    w3, b3 = params["w3"], params["b3"]     # (32, 1), (1, 1)

    cores = int(num_cores) if num_cores is not None else _detect_num_cores()
    cores = max(1, cores)

    n_pad = _round_up(n, LANE)

    # Block selection:
    #  - multi-TC chips (v7x): split the batch so the "parallel" grid axis can
    #    shard it across TensorCores; keep the step count a multiple of cores.
    #  - single-TC chips (v5e/v6e): a single grid step whenever N fits one
    #    block (an extra step is pure per-step overhead there).
    if cores > 1 and n_pad >= cores * LANE:
        per_core = _round_up(-(-n_pad // cores), LANE)
        block = min(block_batch, per_core)
    else:
        block = min(block_batch, n_pad)

    # Inner lane-chunking: make the block a whole number of CHUNK-wide pieces
    # so intermediates stay at (32, CHUNK) regardless of block size.
    if block >= CHUNK:
        block = _round_up(block, CHUNK)
        chunk = CHUNK
    else:
        chunk = block

    n_total = _round_up(n_pad, block)
    steps = n_total // block
    if cores > 1 and steps % cores != 0:
        steps = _round_up(steps, cores)      # balanced work per TensorCore
        n_total = steps * block
    grid = (steps,)

    # Single cheap relayout: (N, 1) -> lane-dense (1, n_total).
    t_row = jnp.pad(t[:, 0].astype(jnp.float32), (0, n_total - n))[None, :]

    full = lambda i: (0, 0)  # weights/biases: whole-array block, grid-resident

    flops = 2 * n_total * (HIDDEN + HIDDEN * HIDDEN + HIDDEN)
    transcendentals = 2 * HIDDEN * n_total
    bytes_accessed = 4 * (2 * n_total + 3 * HIDDEN + HIDDEN * HIDDEN + HIDDEN + 1)

    kernel = functools.partial(_pinn_kernel, chunk=chunk, bf16_tanh=bf16_tanh)

    out_row = pl.pallas_call(
        kernel,
        out_shape=jax.ShapeDtypeStruct((1, n_total), jnp.float32),
        grid_spec=pltpu.PrefetchScalarGridSpec(
            num_scalar_prefetch=0,
            grid=grid,
            in_specs=[
                pl.BlockSpec((1, block), lambda i: (0, i)),         # t (lane-dense)
                pl.BlockSpec((HIDDEN, 1), full),                    # W1 (32,1)
                pl.BlockSpec((HIDDEN, 1), full),                    # b1 (32,1)
                pl.BlockSpec((HIDDEN, HIDDEN), full),               # W2 (32,32)
                pl.BlockSpec((HIDDEN, 1), full),                    # b2 (32,1)
                pl.BlockSpec((HIDDEN, 1), full),                    # W3 (32,1)
                pl.BlockSpec(memory_space=pltpu.MemorySpace.SMEM),  # b3 scalar
            ],
            out_specs=pl.BlockSpec((1, block), lambda i: (0, i)),   # lane-dense out
        ),
        compiler_params=pltpu.CompilerParams(
            dimension_semantics=("parallel",),
        ),
        cost_estimate=pl.CostEstimate(
            flops=flops,
            transcendentals=transcendentals,
            bytes_accessed=bytes_accessed,
        ),
    )(t_row, w1, b1, w2, b2, w3, b3)

    return out_row[0, :n, None]


def init_params(key):
    """Deterministic init mimicking PyTorch nn.Linear defaults
    (uniform in [-1/sqrt(fan_in), 1/sqrt(fan_in)]), stored feature-major."""
    def linear(k, fan_in, fan_out):
        kw, kb = jax.random.split(k)
        bound = 1.0 / jnp.sqrt(jnp.float32(fan_in))
        w = jax.random.uniform(kw, (fan_out, fan_in), jnp.float32, -bound, bound)
        b = jax.random.uniform(kb, (fan_out, 1), jnp.float32, -bound, bound)
        return w, b

    k1, k2, k3 = jax.random.split(key, 3)
    w1, b1 = linear(k1, 1, HIDDEN)       # (32, 1), (32, 1)
    w2, b2 = linear(k2, HIDDEN, HIDDEN)  # (32, 32), (32, 1)   (out, in)
    w3, b3 = linear(k3, HIDDEN, 1)       # (1, 32),  (1, 1)
    return {"w1": w1, "b1": b1, "w2": w2, "b2": b2, "w3": w3.T, "b3": b3}


def pinn_forward_ref(t, params):
    """Pure-JAX reference in the usual (N, features) layout."""
    h1 = jnp.tanh(t @ params["w1"].T + params["b1"].T)     # (N, 32)
    h2 = jnp.tanh(h1 @ params["w2"].T + params["b2"].T)    # (N, 32)
    return h2 @ params["w3"] + params["b3"]                # (N, 1)


if __name__ == "__main__":
    key = jax.random.PRNGKey(0)
    pkey, tkey1, tkey2 = jax.random.split(key, 3)

    params = init_params(pkey)

    # Small demo batch (single grid step on single-TC chips).
    n = 256
    t = jax.random.uniform(tkey1, (n, 1), jnp.float32, 0.0, 10.0)
    out = jax.block_until_ready(pinn_forward(t, params))
    ref = pinn_forward_ref(t, params)
    assert out.shape == (n, 1) and out.dtype == jnp.float32
    assert jnp.allclose(out, ref, atol=1e-5, rtol=1e-5), "mismatch vs JAX reference"

    # Ragged, multi-chunk batch: exercises the in-kernel lane-chunk loop + padding.
    n2 = 4100
    t2 = jax.random.uniform(tkey2, (n2, 1), jnp.float32, 0.0, 10.0)
    out2 = jax.block_until_ready(pinn_forward(t2, params))
    ref2 = pinn_forward_ref(t2, params)
    assert out2.shape == (n2, 1)
    assert jnp.allclose(out2, ref2, atol=1e-5, rtol=1e-5), "mismatch (chunked path)"

    print("KERNEL_OK")
</pallas_src>

<mosaic_0001>
module attributes {stable_mosaic.version = 11 : i64} {
  func.func @_pinn_kernel(%arg0: i32, %arg1: memref<1x256xf32, #tpu.memory_space<vmem>>, %arg2: memref<32x1xf32, #tpu.memory_space<vmem>>, %arg3: memref<32x1xf32, #tpu.memory_space<vmem>>, %arg4: memref<32x32xf32, #tpu.memory_space<vmem>>, %arg5: memref<32x1xf32, #tpu.memory_space<vmem>>, %arg6: memref<32x1xf32, #tpu.memory_space<vmem>>, %arg7: memref<1x1xf32, #tpu.memory_space<smem>>, %arg8: memref<1x256xf32, #tpu.memory_space<vmem>>) attributes {dimension_semantics = [#tpu.dimension_semantics<parallel>], iteration_bounds = array<i64: 1>, scalar_prefetch = 0 : i64, scratch_operands = 0 : i64, tpu.core_type = #tpu.core_type<tc>, window_params = [{transform_indices = @transform_0, window_bounds = array<i64: 1, 256>}, {pipeline_mode = #tpu.pipeline_mode<synchronous>, transform_indices = @transform_1, window_bounds = array<i64: 32, 1>}, {pipeline_mode = #tpu.pipeline_mode<synchronous>, transform_indices = @transform_2, window_bounds = array<i64: 32, 1>}, {pipeline_mode = #tpu.pipeline_mode<synchronous>, transform_indices = @transform_3, window_bounds = array<i64: 32, 32>}, {pipeline_mode = #tpu.pipeline_mode<synchronous>, transform_indices = @transform_4, window_bounds = array<i64: 32, 1>}, {pipeline_mode = #tpu.pipeline_mode<synchronous>, transform_indices = @transform_5, window_bounds = array<i64: 32, 1>}, {transform_indices = @transform_6, window_bounds = array<i64: 1, 1>}, {transform_indices = @transform_7, window_bounds = array<i64: 1, 256>}]} {
    %c0 = arith.constant 0 : index
    %c0_0 = arith.constant 0 : index
    %0 = vector.load %arg2[%c0, %c0_0] : memref<32x1xf32, #tpu.memory_space<vmem>>, vector<32x1xf32>
    %c0_1 = arith.constant 0 : index
    %c0_2 = arith.constant 0 : index
    %1 = vector.load %arg3[%c0_1, %c0_2] : memref<32x1xf32, #tpu.memory_space<vmem>>, vector<32x1xf32>
    %c0_3 = arith.constant 0 : index
    %c0_4 = arith.constant 0 : index
    %2 = vector.load %arg4[%c0_3, %c0_4] : memref<32x32xf32, #tpu.memory_space<vmem>>, vector<32x32xf32>
    %c0_5 = arith.constant 0 : index
    %c0_6 = arith.constant 0 : index
    %3 = vector.load %arg5[%c0_5, %c0_6] : memref<32x1xf32, #tpu.memory_space<vmem>>, vector<32x1xf32>
    %c0_7 = arith.constant 0 : index
    %c0_8 = arith.constant 0 : index
    %4 = vector.load %arg6[%c0_7, %c0_8] : memref<32x1xf32, #tpu.memory_space<vmem>>, vector<32x1xf32>
    %c0_9 = arith.constant 0 : index
    %c0_10 = arith.constant 0 : index
    %5 = memref.load %arg7[%c0_9, %c0_10] : memref<1x1xf32, #tpu.memory_space<smem>>
    %c0_i32 = arith.constant 0 : i32
    %c256_i32 = arith.constant 256 : i32
    %6 = arith.muli %c0_i32, %c256_i32 : i32
    %7 = tpu.assume_multiple %6, 256 : i32
    %c0_11 = arith.constant 0 : index
    %8 = arith.index_cast %7 : i32 to index
    %9 = vector.load %arg1[%c0_11, %8] : memref<1x256xf32, #tpu.memory_space<vmem>>, vector<1x256xf32>
    %10 = vector.broadcast %0 : vector<32x1xf32> to vector<32x256xf32>
    %11 = vector.broadcast %9 : vector<1x256xf32> to vector<32x256xf32>
    %12 = arith.mulf %10, %11 : vector<32x256xf32>
    %13 = vector.broadcast %1 : vector<32x1xf32> to vector<32x256xf32>
    %14 = arith.addf %12, %13 : vector<32x256xf32>
    %15 = math.tanh %14 : vector<32x256xf32>
    %cst = arith.constant dense<0.000000e+00> : vector<32x256xf32>
    %16 = tpu.matmul %2, %15, %cst {dimension_numbers = #tpu.dot_dimension_numbers<[1], [0], [0], [1], [0, 0, 1, 1], [], []>} : vector<32x32xf32>, vector<32x256xf32>, vector<32x256xf32> -> vector<32x256xf32>
    %17 = vector.broadcast %3 : vector<32x1xf32> to vector<32x256xf32>
    %18 = arith.addf %16, %17 : vector<32x256xf32>
    %19 = math.tanh %18 : vector<32x256xf32>
    %20 = vector.broadcast %4 : vector<32x1xf32> to vector<32x256xf32>
    %21 = arith.mulf %20, %19 : vector<32x256xf32>
    %cst_12 = arith.constant dense<0.000000e+00> : vector<256xf32>
    %22 = vector.multi_reduction <add>, %21, %cst_12 [0] : vector<32x256xf32> to vector<256xf32>
    %23 = vector.shape_cast %22 : vector<256xf32> to vector<1x256xf32>
    %24 = vector.broadcast %5 : f32 to vector<1x256xf32>
    %25 = arith.addf %23, %24 : vector<1x256xf32>
    %c0_13 = arith.constant 0 : index
    %26 = arith.index_cast %7 : i32 to index
    %27 = vector.load %arg8[%c0_13, %26] : memref<1x256xf32, #tpu.memory_space<vmem>>, vector<1x256xf32>
    tpu.vector_store %arg8[%c0_13, %26], %25 {strides = array<i32>} : memref<1x256xf32, #tpu.memory_space<vmem>>, vector<1x256xf32>,
    %c1_i32 = arith.constant 1 : i32
    return
  }
  func.func @transform_0(%arg0: i32) -> (i32, i32) {
    %c0_i32 = arith.constant 0 : i32
    %c0_i32_0 = arith.constant 0 : i32
    return %c0_i32, %arg0 : i32, i32
  }
  func.func @transform_1(%arg0: i32) -> (i32, i32) {
    %c0_i32 = arith.constant 0 : i32
    %c0_i32_0 = arith.constant 0 : i32
    %c0_i32_1 = arith.constant 0 : i32
    return %c0_i32, %c0_i32_0 : i32, i32
  }
  func.func @transform_2(%arg0: i32) -> (i32, i32) {
    %c0_i32 = arith.constant 0 : i32
    %c0_i32_0 = arith.constant 0 : i32
    %c0_i32_1 = arith.constant 0 : i32
    return %c0_i32, %c0_i32_0 : i32, i32
  }
  func.func @transform_3(%arg0: i32) -> (i32, i32) {
    %c0_i32 = arith.constant 0 : i32
    %c0_i32_0 = arith.constant 0 : i32
    %c0_i32_1 = arith.constant 0 : i32
    return %c0_i32, %c0_i32_0 : i32, i32
  }
  func.func @transform_4(%arg0: i32) -> (i32, i32) {
    %c0_i32 = arith.constant 0 : i32
    %c0_i32_0 = arith.constant 0 : i32
    %c0_i32_1 = arith.constant 0 : i32
    return %c0_i32, %c0_i32_0 : i32, i32
  }
  func.func @transform_5(%arg0: i32) -> (i32, i32) {
    %c0_i32 = arith.constant 0 : i32
    %c0_i32_0 = arith.constant 0 : i32
    %c0_i32_1 = arith.constant 0 : i32
    return %c0_i32, %c0_i32_0 : i32, i32
  }
  func.func @transform_6(%arg0: i32) -> (i32, i32) {
    %c0_i32 = arith.constant 0 : i32
    %c0_i32_0 = arith.constant 0 : i32
    %c0_i32_1 = arith.constant 0 : i32
    return %c0_i32, %c0_i32_0 : i32, i32
  }
  func.func @transform_7(%arg0: i32) -> (i32, i32) {
    %c0_i32 = arith.constant 0 : i32
    %c0_i32_0 = arith.constant 0 : i32
    return %c0_i32, %arg0 : i32, i32
  }
}

</mosaic_0001>

<llo_original>
// kernel: pinn_forward.1
$region0: #{pinn_forward.1}
  #allocation0 [shape = 'u32[]', space=smem, size = 0x4, offset = 0x4, fixed_abs, tag = 'smem constant byte address 0x4 - core index']
  #allocation1 [shape = 'u32[72,128]{1,0:T(1,128)}', space=vmem, size = 0x9000, scoped, tag = 'internal scratch']
  #allocation2 [shape = 'f32[1,1]{1,0:T(1,128)S(6)}', space=smem, size = 0x200, scoped, tag = 'scoped memory for pinn_forward.1']
  %s0 = inlined_call_operand.vmem [shape: f32[1,256], index: 0, kind: input, shape index: {}]
  %s1 = inlined_call_operand.vmem [shape: f32[32,1], index: 1, kind: input, shape index: {}]
  %s2 = inlined_call_operand.vmem [shape: f32[32,1], index: 2, kind: input, shape index: {}]
  %s3 = inlined_call_operand.vmem [shape: f32[32,32], index: 3, kind: input, shape index: {}]
  %s4 = inlined_call_operand.vmem [shape: f32[32,1], index: 4, kind: input, shape index: {}]
  %s5 = inlined_call_operand.vmem [shape: f32[32,1], index: 5, kind: input, shape index: {}]
  %s6 = inlined_call_operand.<no memory space> [shape: f32[1,1], index: 6, kind: input, shape index: {}]
  %s7 = inlined_call_operand.hbm [shape: f32[1,256], index: 7, kind: output, shape index: {}]
  %s8 = sld [smem:[#allocation0]]
  $region38: #{pinn_forward.1} parent=0
    _
  %s10 = ssub.s32 1, %s8
  %s11 = scalar_select 0, %s10, %s8
  %12 = sst [smem:[#allocation2]] %s6
  $region1: #{pinn_forward.1} parent=0
    #allocation3 [shape = 'u8[1024]{0}', space=vmem, size = 0x400, scoped, tag = 'output window, operand 0, single buffered']
    #allocation4 [shape = 's32[1]{0}', space=sflag, size = 0x4, scoped, tag = 'scoped memory for pinn_forward.1']
    %13 = vsyncpa [#allocation4], 0
    // Predicated region
    $region2: #{pinn_forward.1} parent=1 // pred_check
      _
    $region3: #{pinn_forward.1} parent=1 // pred_check_branch
      %15 = sbr.rel (0) target = $region5
    $region4: #{pinn_forward.1} parent=1 // pred_region
      _
    $region5: #{pinn_forward.1} parent=1 // pred_fallthru
      _
    // Predicated region
    $region6: #{pinn_forward.1} parent=1 // pred_check
      _
    $region7: #{pinn_forward.1} parent=1 // pred_check_branch
      %17 = sbr.rel (0) target = $region9
    $region8: #{pinn_forward.1} parent=1 // pred_region
      _
    $region9: #{pinn_forward.1} parent=1 // pred_fallthru
      _
    // Predicated region
    $region10: #{pinn_forward.1} parent=1 // pred_check
      _
    $region11: #{pinn_forward.1} parent=1 // pred_check_branch
      %19 = sbr.rel (0) target = $region13
    $region12: #{pinn_forward.1} parent=1 // pred_region
      _
    $region13: #{pinn_forward.1} parent=1 // pred_fallthru
      _
    // Predicated region
    $region14: #{pinn_forward.1} parent=1 // pred_check
      _
    $region15: #{pinn_forward.1} parent=1 // pred_check_branch
      %21 = sbr.rel (0) target = $region17
    $region16: #{pinn_forward.1} parent=1 // pred_region
      _
    $region17: #{pinn_forward.1} parent=1 // pred_fallthru
      _
    // Predicated region
    $region18: #{pinn_forward.1} parent=1 // pred_check
      _
    $region19: #{pinn_forward.1} parent=1 // pred_check_branch
      %23 = sbr.rel (0) target = $region21
    $region20: #{pinn_forward.1} parent=1 // pred_region
      _
    $region21: #{pinn_forward.1} parent=1 // pred_fallthru
      _
    // Predicated region
    $region22: #{pinn_forward.1} parent=1 // pred_check
      _
    $region23: #{pinn_forward.1} parent=1 // pred_check_branch
      %25 = sbr.rel (0) target = $region25
    $region24: #{pinn_forward.1} parent=1 // pred_region
      _
    $region25: #{pinn_forward.1} parent=1 // pred_fallthru
      _
    // Predicated region
    $region26: #{pinn_forward.1} parent=1 // pred_check
      _
    $region27: #{pinn_forward.1} parent=1 // pred_check_branch
      %27 = sbr.rel (0) target = $region29
    $region28: #{pinn_forward.1} parent=1 // pred_region
      _
    $region29: #{pinn_forward.1} parent=1 // pred_fallthru
      _
    %v28 = vld [vmem:[%s1] sm:$0xff]
    %v29 = vld [vmem:[%s1 + $0x8] sm:$0xff]
    %v30 = vld [vmem:[%s1 + $0x10] sm:$0xff]
    %v31 = vld [vmem:[%s1 + $0x18] sm:$0xff]
    %v32 = vld [vmem:[%s2] sm:$0xff]
    %v33 = vld [vmem:[%s2 + $0x8] sm:$0xff]
    %v34 = vld [vmem:[%s2 + $0x10] sm:$0xff]
    %v35 = vld [vmem:[%s2 + $0x18] sm:$0xff]
    %v36 = vld [vmem:[%s3] sm:$0xff]
    %v37 = vld [vmem:[%s3 + $0x8] sm:$0xff]
    %v38 = vld [vmem:[%s3 + $0x10] sm:$0xff]
    %v39 = vld [vmem:[%s3 + $0x18] sm:$0xff]
    %v40 = vld [vmem:[%s4] sm:$0xff]
    %v41 = vld [vmem:[%s4 + $0x8] sm:$0xff]
    %v42 = vld [vmem:[%s4 + $0x10] sm:$0xff]
    %v43 = vld [vmem:[%s4 + $0x18] sm:$0xff]
    %v44 = vld [vmem:[%s5] sm:$0xff]
    %v45 = vld [vmem:[%s5 + $0x8] sm:$0xff]
    %v46 = vld [vmem:[%s5 + $0x10] sm:$0xff]
    %v47 = vld [vmem:[%s5 + $0x18] sm:$0xff]
    %s48 = sld [smem:[#allocation2]]
    %v49 = vld [vmem:[%s0] sm:$0x3]
    %51 = vset.pattern.permute.xlu0 0
    %52 = vperm.xlu0 %51, %v28
    %v53 = vpop.permute.xlu0 %52
    %56 = vset.pattern.permute.xlu0 0
    %57 = vperm.xlu0 %56, %v29
    %v58 = vpop.permute.xlu0 %57
    %61 = vset.pattern.permute.xlu0 0
    %62 = vperm.xlu0 %61, %v30
    %v63 = vpop.permute.xlu0 %62
    %66 = vset.pattern.permute.xlu0 0
    %67 = vperm.xlu0 %66, %v31
    %v68 = vpop.permute.xlu0 %67
    %v71 = vperm.slane %v49, 0
    %v72 = vperm.slane %v49, 1
    %v75 = vmul.f32 %v53, %v71
    %v76 = vmul.f32 %v53, %v72
    %v77 = vmul.f32 %v58, %v71
    %v78 = vmul.f32 %v58, %v72
    %v79 = vmul.f32 %v63, %v71
    %v80 = vmul.f32 %v63, %v72
    %v81 = vmul.f32 %v68, %v71
    %v82 = vmul.f32 %v68, %v72
    %84 = vset.pattern.permute.xlu0 0
    %85 = vperm.xlu0 %84, %v32
    %v86 = vpop.permute.xlu0 %85
    %89 = vset.pattern.permute.xlu0 0
    %90 = vperm.xlu0 %89, %v33
    %v91 = vpop.permute.xlu0 %90
    %94 = vset.pattern.permute.xlu0 0
    %95 = vperm.xlu0 %94, %v34
    %v96 = vpop.permute.xlu0 %95
    %99 = vset.pattern.permute.xlu0 0
    %100 = vperm.xlu0 %99, %v35
    %v101 = vpop.permute.xlu0 %100
    %v103 = vadd.f32 %v75, %v86
    %v104 = vadd.f32 %v76, %v86
    %v105 = vadd.f32 %v77, %v91
    %v106 = vadd.f32 %v78, %v91
    %v107 = vadd.f32 %v79, %v96
    %v108 = vadd.f32 %v80, %v96
    %v109 = vadd.f32 %v81, %v101
    %v110 = vadd.f32 %v82, %v101
    %v111 = vtanh.pop %v103
    %v112 = vtanh.pop %v104
    %v113 = vtanh.pop %v105
    %v114 = vtanh.pop %v106
    %v115 = vtanh.pop %v107
    %v116 = vtanh.pop %v108
    %v117 = vtanh.pop %v109
    %v118 = vtanh.pop %v110
    %120 = vset.pattern.permute.xlu0 0
    %121 = vperm.xlu0 %120, %v40
    %v122 = vpop.permute.xlu0 %121
    %125 = vset.pattern.permute.xlu0 0
    %126 = vperm.xlu0 %125, %v41
    %v127 = vpop.permute.xlu0 %126
    %130 = vset.pattern.permute.xlu0 0
    %131 = vperm.xlu0 %130, %v42
    %v132 = vpop.permute.xlu0 %131
    %135 = vset.pattern.permute.xlu0 0
    %136 = vperm.xlu0 %135, %v43
    %v137 = vpop.permute.xlu0 %136
    %vm139 = vcmask 261120
    %v141 = vsel %vm139, %v36, 0
    %v144 = vsel %vm139, %v37, 0
    %v147 = vsel %vm139, %v38, 0
    %v150 = vsel %vm139, %v39, 0
    %152 = vmatpush.msra.mxu0 0.0
    %153 = vmatpush.msra.mxu0 0.0
    %154 = vmatpush.msra.mxu0 0.0
    %155 = vmatpush.msra.mxu0 0.0
    %156 = vmatpush.msra.mxu0 0.0
    %157 = vmatpush.msra.mxu0 0.0
    %158 = vmatpush.msra.mxu0 0.0
    %159 = vmatpush.msra.mxu0 0.0
    %160 = vmatpush.msra.mxu0 0.0
    %161 = vmatpush.msra.mxu0 0.0
    %162 = vmatpush.msra.mxu0 0.0
    %163 = vmatpush.msra.mxu0 0.0
    %164 = vmatpush.msra.mxu0 %v117
    %165 = vmatpush.msra.mxu0 %v115
    %166 = vmatpush.msra.mxu0 %v113
    %167 = vmatpush.msra.mxu0 %v111
    %168 = vmatmul.f32.gmra.mxu0 %v141
    %v169 = vpop.f32.mrf.mxu0
    %v170 = vadd.f32 %v122, %v169
    %171 = vmatmul.f32.gmra.mxu0 %v144
    %v172 = vpop.f32.mrf.mxu0
    %v173 = vadd.f32 %v127, %v172
    %174 = vmatmul.f32.gmra.mxu0 %v147
    %v175 = vpop.f32.mrf.mxu0
    %v176 = vadd.f32 %v132, %v175
    %177 = vmatmul.f32.gmra.mxu0 %v150
    %v178 = vpop.f32.mrf.mxu0
    %v179 = vadd.f32 %v137, %v178
    %180 = vdwg.mxu0
    %181 = vmatpush.msra.mxu0 0.0
    %182 = vmatpush.msra.mxu0 0.0
    %183 = vmatpush.msra.mxu0 0.0
    %184 = vmatpush.msra.mxu0 0.0
    %185 = vmatpush.msra.mxu0 0.0
    %186 = vmatpush.msra.mxu0 0.0
    %187 = vmatpush.msra.mxu0 0.0
    %188 = vmatpush.msra.mxu0 0.0
    %189 = vmatpush.msra.mxu0 0.0
    %190 = vmatpush.msra.mxu0 0.0
    %191 = vmatpush.msra.mxu0 0.0
    %192 = vmatpush.msra.mxu0 0.0
    %193 = vmatpush.msra.mxu0 %v118
    %194 = vmatpush.msra.mxu0 %v116
    %195 = vmatpush.msra.mxu0 %v114
    %196 = vmatpush.msra.mxu0 %v112
    %197 = vmatmul.f32.gmra.mxu0 %v141
    %v198 = vpop.f32.mrf.mxu0
    %v199 = vadd.f32 %v122, %v198
    %200 = vmatmul.f32.gmra.mxu0 %v144
    %v201 = vpop.f32.mrf.mxu0
    %v202 = vadd.f32 %v127, %v201
    %203 = vmatmul.f32.gmra.mxu0 %v147
    %v204 = vpop.f32.mrf.mxu0
    %v205 = vadd.f32 %v132, %v204
    %206 = vmatmul.f32.gmra.mxu0 %v150
    %v207 = vpop.f32.mrf.mxu0
    %v208 = vadd.f32 %v137, %v207
    %209 = vdwg.mxu0
    %v210 = vtanh.pop %v170
    %v211 = vtanh.pop %v199
    %v212 = vtanh.pop %v173
    %v213 = vtanh.pop %v202
    %v214 = vtanh.pop %v176
    %v215 = vtanh.pop %v205
    %v216 = vtanh.pop %v179
    %v217 = vtanh.pop %v208
    %219 = vset.pattern.permute.xlu0 0
    %220 = vperm.xlu0 %219, %v44
    %v221 = vpop.permute.xlu0 %220
    %224 = vset.pattern.permute.xlu0 0
    %225 = vperm.xlu0 %224, %v45
    %v226 = vpop.permute.xlu0 %225
    %229 = vset.pattern.permute.xlu0 0
    %230 = vperm.xlu0 %229, %v46
    %v231 = vpop.permute.xlu0 %230
    %234 = vset.pattern.permute.xlu0 0
    %235 = vperm.xlu0 %234, %v47
    %v236 = vpop.permute.xlu0 %235
    %v238 = vmul.f32 %v221, %v210
    %v239 = vmul.f32 %v221, %v211
    %v240 = vmul.f32 %v226, %v212
    %v241 = vmul.f32 %v226, %v213
    %v242 = vmul.f32 %v231, %v214
    %v243 = vmul.f32 %v231, %v215
    %v244 = vmul.f32 %v236, %v216
    %v245 = vmul.f32 %v236, %v217
    %v246 = vadd.f32 %v238, %v240
    %v247 = vadd.f32 %v246, %v242
    %v248 = vadd.f32 %v247, %v244
    %v249 = vrot.slane %v248, 4
    %v250 = vadd.f32 %v248, %v249
    %v251 = vrot.slane %v250, 2
    %v252 = vadd.f32 %v250, %v251
    %v253 = vrot.slane %v252, 1
    %v254 = vadd.f32 %v252, %v253
    %v255 = vadd.f32 %v239, %v241
    %v256 = vadd.f32 %v255, %v243
    %v257 = vadd.f32 %v256, %v245
    %v258 = vrot.slane %v257, 4
    %v259 = vadd.f32 %v257, %v258
    %v260 = vrot.slane %v259, 2
    %v261 = vadd.f32 %v259, %v260
    %v262 = vrot.slane %v261, 1
    %v263 = vadd.f32 %v261, %v262
    %v264 = vstv %s48
    %v265 = vadd.f32 %v254, %v264
    %v266 = vadd.f32 %v263, %v264
    %v269 = vrot.slane %v266, 7
    %vm270 = vcmask 1040384
    %v271 = vsel %vm270, %v265, %v269
    %v273 = vlaneseq
    %vm274 = vcmp.ge.s32.totalorder %v273, 0
    %vm275 = vcmp.lt.s32.totalorder %v273, 256
    %vm276 = vmand %vm274, %vm275
    %277 = vst.msk [vmem:[#allocation3] sm:$0x3] %vm276, %v271
    // Predicated region
    $region30: #{pinn_forward.1} parent=1 // pred_check
      _
    $region31: #{pinn_forward.1} parent=1 // pred_check_branch
      %279 = sbr.rel (0) target = $region33
    $region32: #{pinn_forward.1} parent=1 // pred_region
      %281 = vsyncadd [#allocation4], 0
      %s283 = sshll.u32 [#allocation3], 4
      %s284 = int_to_ptr.vmem [resolvable:$true] %s283
      %s285 = sshll.u32 %s7, 4
      %s286 = int_to_ptr.hbm [resolvable:$true] %s285
      %288 = dma.vmem_to_hbm [thread:$0]  %s284, 32, %s286, [#allocation4]
    $region33: #{pinn_forward.1} parent=1 // pred_fallthru
      _
    // Predicated region
    $region34: #{pinn_forward.1} parent=1 // pred_check
      _
    $region35: #{pinn_forward.1} parent=1 // pred_check_branch
      %290 = sbr.rel (0) target = $region37
    $region36: #{pinn_forward.1} parent=1 // pred_region
      %292 = dma.done [#allocation4], 32
    $region37: #{pinn_forward.1} parent=1 // pred_fallthru
      _
    %293 = vsyncpa [#allocation4], 1

</llo_original>
